<compile_context>
chip_gen: v7x
topology: tpu7x:2x2x1
jax: 0.10.0
libtpu: 0.0.40
codegen_flags: <defaults>
</compile_context>

<pallas_src>
import functools

import jax
import jax.numpy as jnp
import numpy as np
from jax.experimental import pallas as pl
from jax.experimental.pallas import tpu as pltpu

LEAKY_SLOPE = 0.2
BN_EPS = 0.8  # nn.BatchNorm2d(out_channels, 0.8): second positional arg is eps


# ----------------------------- pass 1: conv + partial BN stats -----------------------------
def conv_stats_kernel(xs_ref, w_ref, mask_ref, z_ref, sum_ref, ssq_ref, *, ndi, ndj, wq, tile_oh):
    """One (image, row-tile) step: 4 shifted MXU matmuls + per-tile sum / sum-of-squares."""
    L = tile_oh * wq
    cout = w_ref.shape[1]
    acc = jnp.zeros((cout, L), jnp.float32)
    for di in range(ndi):
        for dj in range(ndj):
            off = di * wq + dj                       # static lane offset of this shift
            rhs = xs_ref[0, 0, :, off:off + L]       # (s*s*Cin, L) bf16, direct strip slice
            lhs = w_ref[di * ndj + dj]               # (Cout, s*s*Cin) bf16 per-shift weights
            acc = acc + jnp.dot(lhs, rhs, preferred_element_type=jnp.float32)
    z_ref[0, 0] = acc.astype(z_ref.dtype)            # lane-dense bf16 intermediate
    accm = acc * mask_ref[...]                        # zero the Wq>OW garbage lanes for the stats
    sum_ref[0, 0] = jnp.sum(accm, axis=1, keepdims=True)
    ssq_ref[0, 0] = jnp.sum(accm * accm, axis=1, keepdims=True)


# ----------------------------- pass 2: BN scale/shift + LeakyReLU --------------------------
def bn_act_kernel(z_ref, scale_ref, shift_ref, o_ref, *, ow, slope):
    z = z_ref[0, 0].astype(jnp.float32)              # (Cout, TILE_OH, Wq)
    y = z * scale_ref[...] + shift_ref[...]          # folded BN (or identity/bias path)
    if slope != 1.0:
        y = jnp.where(y >= 0.0, y, slope * y)        # LeakyReLU(0.2)
    # drop the garbage columns and write the final NCHW block exactly once
    o_ref[0] = y[:, :, :ow].astype(o_ref.dtype)


# ----------------------------- generation-aware sizing -------------------------------------
def _vmem_budgets():
    """(soft budget for tile sizing, hard vmem_limit_bytes) - generation aware."""
    try:
        cap = int(pltpu.get_tpu_info().vmem_capacity_bytes)
    except Exception:
        cap = 64 << 20  # conservative (v7x-sized) fallback
    budget = min(int(cap * 0.75), 96 << 20)    # v7x -> ~48 MiB, v5e/v6e -> 96 MiB
    limit = min(int(cap * 0.85), 100 << 20)    # v7x -> ~54 MiB, v5e/v6e -> 100 MiB
    return budget, limit


def _pick_tile_oh(oh, ow, wq, cin, cout, stride, kh, budget_bytes):
    """Largest output-row tile (multiple of 8 dividing OH, or OH itself) fitting the budget."""
    lane = lambda v: ((v + 127) // 128) * 128
    sub = lambda v: ((v + 7) // 8) * 8
    c4 = stride * stride * cin
    max_di = (kh - 1) // stride

    def need(t):
        L, Lq = t * wq, (t + max_di) * wq + 8
        xs_blk = sub(c4) * lane(Lq) * 2          # bf16 strip block (double buffered)
        z_blk = sub(cout) * lane(L) * 2          # bf16 conv-out block
        acc = sub(cout) * lane(L) * 4            # f32 accumulator value
        p2_in = sub(cout) * sub(t) * lane(wq) * 2    # pass-2 z block (padded VMEM layout)
        p2_out = sub(cout) * sub(t) * lane(ow) * 4   # pass-2 output block
        return 2 * xs_blk + 2 * z_blk + 2 * acc + 2 * p2_in + 2 * p2_out + (2 << 20)

    cands = sorted({d for d in range(8, oh + 1, 8) if oh % d == 0} | {oh})
    best = None
    for t in cands:
        if need(t) <= budget_bytes:
            best = t
    return best if best is not None else cands[0]


# ----------------------------- wrapper -------------------------------------------------------
def dblock_forward(x, weight, bias, gamma, beta, *, stride, padding,
                   should_normalize=True, should_activate=True, dropout_val=0.25,
                   tile_oh=None):
    """x: (N, Cin, H, W) NCHW f32/bf16.  weight: (Cout, Cin, KH, KW).  Returns NCHW float32."""
    del dropout_val  # Dropout is identity in eval mode.  TODO(synk): training-mode dropout.
    n, cin, h, w = x.shape
    cout, cin_w, kh, kw = weight.shape
    assert cin == cin_w
    s = stride
    oh = (h + 2 * padding - kh) // s + 1
    ow = (w + 2 * padding - kw) // s + 1
    ndi = (kh - 1) // s + 1                    # number of row shifts   (= ceil-ish of kh/s)
    ndj = (kw - 1) // s + 1                    # number of column shifts
    wq = ow + (ndj - 1)                        # phase-plane width (incl. ndj-1 garbage cols)
    hq = oh + (ndi - 1)
    hp_ext, wp_ext = hq * s, wq * s
    c4 = s * s * cin

    budget, vmem_limit = _vmem_budgets()
    if tile_oh is None:
        tile_oh = _pick_tile_oh(oh, ow, wq, cin, cout, s, kh, budget)
    assert oh % tile_oh == 0 and (tile_oh % 8 == 0 or tile_oh == oh), (tile_oh, oh)
    n_t = oh // tile_oh
    hq_strip = tile_oh + (ndi - 1)             # downsampled rows per strip (incl. halo)
    L = tile_oh * wq                           # lanes per conv tile
    Lq = hq_strip * wq + (ndj - 1)             # strip lanes (+slack so shifted slices fit)

    # ---- the only host-side data movement: ~1x input, in bf16 (no im2col blow-up) ----
    xb = x.astype(jnp.bfloat16)
    xp = jnp.pad(xb, ((0, 0), (0, 0),
                      (padding, hp_ext - h - padding),
                      (padding, wp_ext - w - padding)))
    # stride-phase split: xr[n, pi, pj, c, hq, wq] = xp[n, c, hq*s + pi, wq*s + pj]
    xr = xp.reshape(n, cin, hq, s, wq, s).transpose(0, 3, 5, 1, 2, 4)
    # per-row-tile strips (halo rows duplicated), flattened to the lane layout the kernel reads
    if n_t == 1:
        strips = xr[:, None]
    else:
        strips = jnp.stack([xr[:, :, :, :, t * tile_oh:t * tile_oh + hq_strip, :]
                            for t in range(n_t)], axis=1)
    xs = strips.reshape(n, n_t, c4, hq_strip * wq)
    xs = jnp.pad(xs, ((0, 0), (0, 0), (0, 0), (0, ndj - 1)))          # shape (N, n_t, c4, Lq)

    # per-shift weight matrices: w_shift[di*ndj+dj][o, (pi*s+pj)*cin + c] = W[o, c, di*s+pi, dj*s+pj]
    wpad = jnp.pad(weight, ((0, 0), (0, 0), (0, ndi * s - kh), (0, ndj * s - kw)))
    w_shift = (wpad.reshape(cout, cin, ndi, s, ndj, s)
               .transpose(2, 4, 0, 3, 5, 1)
               .reshape(ndi * ndj, cout, c4)
               .astype(jnp.bfloat16))

    # lane-validity mask for the BN statistics (lanes with wq-column >= ow are garbage)
    mask = jnp.asarray((np.arange(L) % wq < ow).astype(np.float32).reshape(1, L))

    # ---- pass 1: conv tiles + per-tile partial stats (fully parallel, incl. v7x megacore) ----
    kernel1 = functools.partial(conv_stats_kernel, ndi=ndi, ndj=ndj, wq=wq, tile_oh=tile_oh)
    z_flat, sums, ssqs = pl.pallas_call(
        kernel1,
        grid=(n, n_t),
        in_specs=[
            pl.BlockSpec((1, 1, c4, Lq), lambda b, t: (b, t, 0, 0)),        # streamed strip
            pl.BlockSpec((ndi * ndj, cout, c4), lambda b, t: (0, 0, 0)),    # weights (resident)
            pl.BlockSpec((1, L), lambda b, t: (0, 0)),                      # stats lane mask
        ],
        out_specs=(
            pl.BlockSpec((1, 1, cout, L), lambda b, t: (b, t, 0, 0)),       # conv out (bf16)
            pl.BlockSpec((1, 1, cout, 1), lambda b, t: (b, t, 0, 0)),       # per-tile sum
            pl.BlockSpec((1, 1, cout, 1), lambda b, t: (b, t, 0, 0)),       # per-tile sum-of-sq
        ),
        out_shape=(
            jax.ShapeDtypeStruct((n, n_t, cout, L), jnp.bfloat16),
            jax.ShapeDtypeStruct((n, n_t, cout, 1), jnp.float32),
            jax.ShapeDtypeStruct((n, n_t, cout, 1), jnp.float32),
        ),
        compiler_params=pltpu.CompilerParams(
            dimension_semantics=("parallel", "parallel"),
            vmem_limit_bytes=vmem_limit,
        ),
    )(xs, w_shift, mask)

    # ---- tiny cross-tile stat reduction + BN fold (O(Cout) work, plain XLA) ----
    m_valid = float(n * oh * ow)
    mean = jnp.sum(sums, axis=(0, 1)) / m_valid                       # (Cout, 1)
    var = jnp.sum(ssqs, axis=(0, 1)) / m_valid - mean * mean          # biased variance
    if should_normalize:
        scale = gamma.reshape(cout, 1).astype(jnp.float32) * jax.lax.rsqrt(var + BN_EPS)
        shift = beta.reshape(cout, 1).astype(jnp.float32) - mean * scale  # conv bias cancels
    else:
        scale = jnp.ones((cout, 1), jnp.float32)
        shift = bias.reshape(cout, 1).astype(jnp.float32)             # bias not cancelled here
    scale = scale.reshape(cout, 1, 1)
    shift = shift.reshape(cout, 1, 1)
    slope = LEAKY_SLOPE if should_activate else 1.0

    # free bitcast-reshape: split the contiguous lane axis back into (TILE_OH, Wq)
    z_r = z_flat.reshape(n, n_t, cout, tile_oh, wq)

    # ---- pass 2: streamed BN apply + LeakyReLU, writes final NCHW directly (no reshuffle) ----
    kernel2 = functools.partial(bn_act_kernel, ow=ow, slope=slope)
    out = pl.pallas_call(
        kernel2,
        grid=(n, n_t),
        in_specs=[
            pl.BlockSpec((1, 1, cout, tile_oh, wq), lambda b, t: (b, t, 0, 0, 0)),
            pl.BlockSpec((cout, 1, 1), lambda b, t: (0, 0, 0)),
            pl.BlockSpec((cout, 1, 1), lambda b, t: (0, 0, 0)),
        ],
        out_specs=pl.BlockSpec((1, cout, tile_oh, ow), lambda b, t: (b, 0, t, 0)),
        out_shape=jax.ShapeDtypeStruct((n, cout, oh, ow), jnp.float32),  # bf16 also fine downstream
        compiler_params=pltpu.CompilerParams(
            dimension_semantics=("parallel", "parallel"),
            vmem_limit_bytes=vmem_limit,
        ),
    )(z_r, scale, shift)
    # Dropout: identity in eval mode (see TODO at top).
    return out


# ----------------------------- demo / correctness check ------------------------------------
if __name__ == "__main__":
    def reference(x, weight, bias, gamma, beta, stride, padding):
        z = jax.lax.conv_general_dilated(
            x, weight, window_strides=(stride, stride),
            padding=[(padding, padding), (padding, padding)],
            dimension_numbers=("NCHW", "OIHW", "NCHW")) + bias.reshape(1, -1, 1, 1)
        mu = z.mean(axis=(0, 2, 3), keepdims=True)
        var = ((z - mu) ** 2).mean(axis=(0, 2, 3), keepdims=True)
        z = (z - mu) * jax.lax.rsqrt(var + BN_EPS)
        z = z * gamma.reshape(1, -1, 1, 1) + beta.reshape(1, -1, 1, 1)
        return jnp.where(z >= 0.0, z, LEAKY_SLOPE * z)

    # DBlock(in_channels=4, out_channels=8, kernel_size=4, stride=2, padding=1)
    N, CIN, H, W = 2, 4, 16, 16
    COUT, KH, KW, STRIDE, PAD = 8, 4, 4, 2, 1

    key = jax.random.PRNGKey(0)
    kx, kw_, kb, kg, kbt, kx2 = jax.random.split(key, 6)
    fan_in = CIN * KH * KW
    x = jax.random.normal(kx, (N, CIN, H, W), dtype=jnp.float32)
    weight = jax.random.uniform(kw_, (COUT, CIN, KH, KW), jnp.float32,
                                -1.0 / np.sqrt(fan_in), 1.0 / np.sqrt(fan_in))
    bias = jax.random.uniform(kb, (COUT,), jnp.float32,
                              -1.0 / np.sqrt(fan_in), 1.0 / np.sqrt(fan_in))
    gamma = 1.0 + 0.1 * jax.random.normal(kg, (COUT,), jnp.float32)
    beta = 0.1 * jax.random.normal(kbt, (COUT,), jnp.float32)

    # Primary run: auto tile size (single row tile per image at these shapes).
    out = dblock_forward(x, weight, bias, gamma, beta, stride=STRIDE, padding=PAD)
    out = jax.block_until_ready(out)
    assert out.shape == (N, COUT, H // 2, W // 2), out.shape
    ref = reference(x, weight, bias, gamma, beta, STRIDE, PAD)
    np.testing.assert_allclose(np.asarray(out), np.asarray(ref), atol=5e-2, rtol=5e-2)

    # Correctness-only second case: larger image with a deliberately small row tile so the
    # multi-tile / halo-duplication / garbage-lane-masking paths are exercised.
    H2 = W2 = 32
    x2 = jax.random.normal(kx2, (N, CIN, H2, W2), dtype=jnp.float32)
    out2 = dblock_forward(x2, weight, bias, gamma, beta, stride=STRIDE, padding=PAD, tile_oh=8)
    out2 = jax.block_until_ready(out2)
    ref2 = reference(x2, weight, bias, gamma, beta, STRIDE, PAD)
    np.testing.assert_allclose(np.asarray(out2), np.asarray(ref2), atol=5e-2, rtol=5e-2)

    print("KERNEL_OK")
</pallas_src>

<mosaic_0001>
module attributes {stable_mosaic.version = 11 : i64} {
  func.func @conv_stats_kernel(%arg0: i32, %arg1: i32, %arg2: memref<1x1x16x82xbf16, #tpu.memory_space<vmem>>, %arg3: memref<4x8x16xbf16, #tpu.memory_space<vmem>>, %arg4: memref<1x72xf32, #tpu.memory_space<vmem>>, %arg5: memref<1x1x8x72xbf16, #tpu.memory_space<vmem>>, %arg6: memref<1x1x8x1xf32, #tpu.memory_space<vmem>>, %arg7: memref<1x1x8x1xf32, #tpu.memory_space<vmem>>) attributes {dimension_semantics = [#tpu.dimension_semantics<parallel>, #tpu.dimension_semantics<parallel>], iteration_bounds = array<i64: 2, 1>, scalar_prefetch = 0 : i64, scratch_operands = 0 : i64, tpu.core_type = #tpu.core_type<tc>, window_params = [{transform_indices = @transform_0, window_bounds = array<i64: 1, 1, 16, 82>}, {pipeline_mode = #tpu.pipeline_mode<synchronous>, transform_indices = @transform_1, window_bounds = array<i64: 4, 8, 16>}, {pipeline_mode = #tpu.pipeline_mode<synchronous>, transform_indices = @transform_2, window_bounds = array<i64: 1, 72>}, {transform_indices = @transform_3, window_bounds = array<i64: 1, 1, 8, 72>}, {transform_indices = @transform_4, window_bounds = array<i64: 1, 1, 8, 1>}, {transform_indices = @transform_5, window_bounds = array<i64: 1, 1, 8, 1>}]} {
    %cst = arith.constant 0.000000e+00 : f32
    %0 = vector.broadcast %cst : f32 to vector<8x72xf32>
    %c0 = arith.constant 0 : index
    %c0_0 = arith.constant 0 : index
    %c0_1 = arith.constant 0 : index
    %c0_2 = arith.constant 0 : index
    %1 = vector.load %arg2[%c0, %c0_0, %c0_1, %c0_2] : memref<1x1x16x82xbf16, #tpu.memory_space<vmem>>, vector<1x1x16x72xbf16>
    %2 = vector.shape_cast %1 : vector<1x1x16x72xbf16> to vector<16x72xbf16>
    %c0_3 = arith.constant 0 : index
    %c0_4 = arith.constant 0 : index
    %c0_5 = arith.constant 0 : index
    %3 = vector.load %arg3[%c0_3, %c0_4, %c0_5] : memref<4x8x16xbf16, #tpu.memory_space<vmem>>, vector<1x8x16xbf16>
    %4 = vector.shape_cast %3 : vector<1x8x16xbf16> to vector<8x16xbf16>
    %cst_6 = arith.constant dense<0.000000e+00> : vector<8x72xf32>
    %5 = tpu.matmul %4, %2, %cst_6 {dimension_numbers = #tpu.dot_dimension_numbers<[1], [0], [0], [1], [0, 0, 1, 1], [], []>} : vector<8x16xbf16>, vector<16x72xbf16>, vector<8x72xf32> -> vector<8x72xf32>
    %6 = arith.addf %0, %5 : vector<8x72xf32>
    %c0_7 = arith.constant 0 : index
    %c0_8 = arith.constant 0 : index
    %c0_9 = arith.constant 0 : index
    %c1 = arith.constant 1 : index
    %7 = vector.load %arg2[%c0_7, %c0_8, %c0_9, %c1] : memref<1x1x16x82xbf16, #tpu.memory_space<vmem>>, vector<1x1x16x72xbf16>
    %8 = vector.shape_cast %7 : vector<1x1x16x72xbf16> to vector<16x72xbf16>
    %c1_10 = arith.constant 1 : index
    %c0_11 = arith.constant 0 : index
    %c0_12 = arith.constant 0 : index
    %9 = vector.load %arg3[%c1_10, %c0_11, %c0_12] : memref<4x8x16xbf16, #tpu.memory_space<vmem>>, vector<1x8x16xbf16>
    %10 = vector.shape_cast %9 : vector<1x8x16xbf16> to vector<8x16xbf16>
    %cst_13 = arith.constant dense<0.000000e+00> : vector<8x72xf32>
    %11 = tpu.matmul %10, %8, %cst_13 {dimension_numbers = #tpu.dot_dimension_numbers<[1], [0], [0], [1], [0, 0, 1, 1], [], []>} : vector<8x16xbf16>, vector<16x72xbf16>, vector<8x72xf32> -> vector<8x72xf32>
    %12 = arith.addf %6, %11 : vector<8x72xf32>
    %c0_14 = arith.constant 0 : index
    %c0_15 = arith.constant 0 : index
    %c0_16 = arith.constant 0 : index
    %c9 = arith.constant 9 : index
    %13 = vector.load %arg2[%c0_14, %c0_15, %c0_16, %c9] : memref<1x1x16x82xbf16, #tpu.memory_space<vmem>>, vector<1x1x16x72xbf16>
    %14 = vector.shape_cast %13 : vector<1x1x16x72xbf16> to vector<16x72xbf16>
    %c2 = arith.constant 2 : index
    %c0_17 = arith.constant 0 : index
    %c0_18 = arith.constant 0 : index
    %15 = vector.load %arg3[%c2, %c0_17, %c0_18] : memref<4x8x16xbf16, #tpu.memory_space<vmem>>, vector<1x8x16xbf16>
    %16 = vector.shape_cast %15 : vector<1x8x16xbf16> to vector<8x16xbf16>
    %cst_19 = arith.constant dense<0.000000e+00> : vector<8x72xf32>
    %17 = tpu.matmul %16, %14, %cst_19 {dimension_numbers = #tpu.dot_dimension_numbers<[1], [0], [0], [1], [0, 0, 1, 1], [], []>} : vector<8x16xbf16>, vector<16x72xbf16>, vector<8x72xf32> -> vector<8x72xf32>
    %18 = arith.addf %12, %17 : vector<8x72xf32>
    %c0_20 = arith.constant 0 : index
    %c0_21 = arith.constant 0 : index
    %c0_22 = arith.constant 0 : index
    %c10 = arith.constant 10 : index
    %19 = vector.load %arg2[%c0_20, %c0_21, %c0_22, %c10] : memref<1x1x16x82xbf16, #tpu.memory_space<vmem>>, vector<1x1x16x72xbf16>
    %20 = vector.shape_cast %19 : vector<1x1x16x72xbf16> to vector<16x72xbf16>
    %c3 = arith.constant 3 : index
    %c0_23 = arith.constant 0 : index
    %c0_24 = arith.constant 0 : index
    %21 = vector.load %arg3[%c3, %c0_23, %c0_24] : memref<4x8x16xbf16, #tpu.memory_space<vmem>>, vector<1x8x16xbf16>
    %22 = vector.shape_cast %21 : vector<1x8x16xbf16> to vector<8x16xbf16>
    %cst_25 = arith.constant dense<0.000000e+00> : vector<8x72xf32>
    %23 = tpu.matmul %22, %20, %cst_25 {dimension_numbers = #tpu.dot_dimension_numbers<[1], [0], [0], [1], [0, 0, 1, 1], [], []>} : vector<8x16xbf16>, vector<16x72xbf16>, vector<8x72xf32> -> vector<8x72xf32>
    %24 = arith.addf %18, %23 : vector<8x72xf32>
    %25 = arith.truncf %24 : vector<8x72xf32> to vector<8x72xbf16>
    %c0_26 = arith.constant 0 : index
    %c0_27 = arith.constant 0 : index
    %c0_28 = arith.constant 0 : index
    %c0_29 = arith.constant 0 : index
    %26 = vector.load %arg5[%c0_26, %c0_27, %c0_28, %c0_29] : memref<1x1x8x72xbf16, #tpu.memory_space<vmem>>, vector<1x1x8x72xbf16>
    %27 = vector.shape_cast %26 : vector<1x1x8x72xbf16> to vector<8x72xbf16>
    %28 = vector.shape_cast %25 : vector<8x72xbf16> to vector<1x1x8x72xbf16>
    tpu.vector_store %arg5[%c0_26, %c0_27, %c0_28, %c0_29], %28 {strides = array<i32>} : memref<1x1x8x72xbf16, #tpu.memory_space<vmem>>, vector<1x1x8x72xbf16>,
    %c0_30 = arith.constant 0 : index
    %c0_31 = arith.constant 0 : index
    %29 = vector.load %arg4[%c0_30, %c0_31] : memref<1x72xf32, #tpu.memory_space<vmem>>, vector<1x72xf32>
    %30 = vector.broadcast %29 : vector<1x72xf32> to vector<8x72xf32>
    %31 = arith.mulf %24, %30 : vector<8x72xf32>
    %cst_32 = arith.constant dense<0.000000e+00> : vector<8xf32>
    %32 = vector.multi_reduction <add>, %31, %cst_32 [1] : vector<8x72xf32> to vector<8xf32>
    %33 = vector.shape_cast %32 : vector<8xf32> to vector<8x1xf32>
    %c0_33 = arith.constant 0 : index
    %c0_34 = arith.constant 0 : index
    %c0_35 = arith.constant 0 : index
    %c0_36 = arith.constant 0 : index
    %34 = vector.load %arg6[%c0_33, %c0_34, %c0_35, %c0_36] : memref<1x1x8x1xf32, #tpu.memory_space<vmem>>, vector<1x1x8x1xf32>
    %35 = vector.shape_cast %34 : vector<1x1x8x1xf32> to vector<8x1xf32>
    %36 = vector.shape_cast %33 : vector<8x1xf32> to vector<1x1x8x1xf32>
    tpu.vector_store %arg6[%c0_33, %c0_34, %c0_35, %c0_36], %36 {strides = array<i32>} : memref<1x1x8x1xf32, #tpu.memory_space<vmem>>, vector<1x1x8x1xf32>,
    %37 = arith.mulf %31, %31 : vector<8x72xf32>
    %cst_37 = arith.constant dense<0.000000e+00> : vector<8xf32>
    %38 = vector.multi_reduction <add>, %37, %cst_37 [1] : vector<8x72xf32> to vector<8xf32>
    %39 = vector.shape_cast %38 : vector<8xf32> to vector<8x1xf32>
    %c0_38 = arith.constant 0 : index
    %c0_39 = arith.constant 0 : index
    %c0_40 = arith.constant 0 : index
    %c0_41 = arith.constant 0 : index
    %40 = vector.load %arg7[%c0_38, %c0_39, %c0_40, %c0_41] : memref<1x1x8x1xf32, #tpu.memory_space<vmem>>, vector<1x1x8x1xf32>
    %41 = vector.shape_cast %40 : vector<1x1x8x1xf32> to vector<8x1xf32>
    %42 = vector.shape_cast %39 : vector<8x1xf32> to vector<1x1x8x1xf32>
    tpu.vector_store %arg7[%c0_38, %c0_39, %c0_40, %c0_41], %42 {strides = array<i32>} : memref<1x1x8x1xf32, #tpu.memory_space<vmem>>, vector<1x1x8x1xf32>,
    return
  }
  func.func @transform_0(%arg0: i32, %arg1: i32) -> (i32, i32, i32, i32) {
    %c0_i32 = arith.constant 0 : i32
    %c0_i32_0 = arith.constant 0 : i32
    %c0_i32_1 = arith.constant 0 : i32
    return %arg0, %arg1, %c0_i32, %c0_i32_0 : i32, i32, i32, i32
  }
  func.func @transform_1(%arg0: i32, %arg1: i32) -> (i32, i32, i32) {
    %c0_i32 = arith.constant 0 : i32
    %c0_i32_0 = arith.constant 0 : i32
    %c0_i32_1 = arith.constant 0 : i32
    %c0_i32_2 = arith.constant 0 : i32
    return %c0_i32, %c0_i32_0, %c0_i32_1 : i32, i32, i32
  }
  func.func @transform_2(%arg0: i32, %arg1: i32) -> (i32, i32) {
    %c0_i32 = arith.constant 0 : i32
    %c0_i32_0 = arith.constant 0 : i32
    %c0_i32_1 = arith.constant 0 : i32
    return %c0_i32, %c0_i32_0 : i32, i32
  }
  func.func @transform_3(%arg0: i32, %arg1: i32) -> (i32, i32, i32, i32) {
    %c0_i32 = arith.constant 0 : i32
    %c0_i32_0 = arith.constant 0 : i32
    %c0_i32_1 = arith.constant 0 : i32
    return %arg0, %arg1, %c0_i32, %c0_i32_0 : i32, i32, i32, i32
  }
  func.func @transform_4(%arg0: i32, %arg1: i32) -> (i32, i32, i32, i32) {
    %c0_i32 = arith.constant 0 : i32
    %c0_i32_0 = arith.constant 0 : i32
    %c0_i32_1 = arith.constant 0 : i32
    return %arg0, %arg1, %c0_i32, %c0_i32_0 : i32, i32, i32, i32
  }
  func.func @transform_5(%arg0: i32, %arg1: i32) -> (i32, i32, i32, i32) {
    %c0_i32 = arith.constant 0 : i32
    %c0_i32_0 = arith.constant 0 : i32
    %c0_i32_1 = arith.constant 0 : i32
    return %arg0, %arg1, %c0_i32, %c0_i32_0 : i32, i32, i32, i32
  }
}

</mosaic_0001>

<llo_original>
// kernel: tpu_custom_call.1
$region0: #{tpu_custom_call.1}
  #allocation0 [shape = 'u32[]', space=smem, size = 0x4, offset = 0x4, fixed_abs, tag = 'smem constant byte address 0x4 - core index']
  #allocation1 [shape = 'u32[144,128]{1,0:T(1,128)}', space=vmem, size = 0x12000, scoped, tag = 'internal scratch']
  %s0 = inlined_call_operand.hbm [shape: bf16[2,1,16,82], index: 0, kind: input, shape index: {}]
  %s1 = inlined_call_operand.hbm [shape: bf16[4,8,16], index: 1, kind: input, shape index: {}]
  %s2 = inlined_call_operand.vmem [shape: f32[1,72], index: 2, kind: input, shape index: {}]
  %s3 = inlined_call_operand.hbm [shape: bf16[2,1,8,72], index: 3, kind: output, shape index: {0}]
  %s4 = inlined_call_operand.vmem [shape: f32[2,1,8,1], index: 4, kind: output, shape index: {1}]
  %s5 = inlined_call_operand.vmem [shape: f32[2,1,8,1], index: 5, kind: output, shape index: {2}]
  %6 = xla_tuple %s3, %s4, %s5
  %s7 = sld [smem:[#allocation0]]
  $region69: #{tpu_custom_call.1} parent=0
    _
  %s9 = ssub.s32 1, %s7
  %s10 = scalar_select 0, %s9, %s7
  $region1: #{tpu_custom_call.1} parent=0
    #allocation2 [shape = 'u8[8192]{0}', space=vmem, size = 0x2000, scoped, tag = 'input window, operand 0']
    #allocation3 [shape = 's32[2]{0}', space=sflag, size = 0x8, scoped, tag = 'scoped memory for tpu_custom_call.1']
    #allocation4 [shape = 's32[2]{0}', space=sflag, size = 0x8, scoped, tag = 'scoped memory for tpu_custom_call.1']
    #allocation5 [shape = 'u8[8192]{0}', space=vmem, size = 0x2000, scoped, tag = 'input window, operand 1, single buffered']
    #allocation6 [shape = 's32[1]{0}', space=sflag, size = 0x4, scoped, tag = 'scoped memory for tpu_custom_call.1']
    #allocation7 [shape = 'u8[4096]{0}', space=vmem, size = 0x1000, scoped, tag = 'output window, operand 0']
    %11 = vsyncpa [#allocation3], 0
    %s12 = scalar_lea.sflag [#allocation3], 1
    %13 = vsyncpa %s12, 0
    %14 = vsyncpa [#allocation6], 0
    %15 = vsyncpa [#allocation4], 0
    %s16 = scalar_lea.sflag [#allocation4], 1
    %17 = vsyncpa %s16, 0
    loop: start=0, step=1, limit=4
    $region2: #{tpu_custom_call.1} parent=1 // loop_pre_header
      _
    $region3: #{tpu_custom_call.1} parent=1 // loop_header
      %s19 = sphi 0, %s23
      %p20 = scmp.ge.s32.totalorder %s19, 4
      %s26 = sphi 0, %s38
      %s27 = sphi 0, %s34
      %s28 = sphi 0, %s26
      %s29 = sphi 0, %s27
      %s30 = sphi 0, %s28
      %s31 = sphi 0, %s29
      %s43 = sphi 0, %s45
      %s46 = sphi 0, %s43
      %s47 = sphi 0, %s46
      %s63 = sphi 0, %s47
      %s67 = sphi 0, %s67
      %s69 = sphi 0, %s67
      %s70 = sphi 0, %s69
      %s84 = sphi 0, %s70
      %s88 = sphi 0, %s88
      %s90 = sphi 0, %s88
      %s91 = sphi 0, %s90
      %s105 = sphi 0, %s91
      %s113 = sphi 0, %s115
      %s116 = sphi 0, %s113
      %s117 = sphi 0, %s116
      %s133 = sphi 0, %s117
      %s141 = sphi 0, %s143
      %s144 = sphi 0, %s141
      %s145 = sphi 0, %s144
      %s161 = sphi 0, %s145
      %s169 = sphi 0, %s171
      %s172 = sphi 0, %s169
      %s173 = sphi 0, %s172
      %s189 = sphi 0, %s173
    $region4: #{tpu_custom_call.1} parent=1 // loop_header_branch
      %22 = sbr.rel (%p20) target = $region8
    $region5: #{tpu_custom_call.1} parent=1 // loop_body
      %s24 = ssub.s32 %s19, 1
      %s25 = ssub.s32 %s19, 2
      %s32 = sadd.s32 1, %s27
      %p33 = scmp.ge.s32.totalorder %s32, 1
      %s34 = scalar_select %p33, 0, %s32
      %s35 = sadd.s32 1, %s26
      %s36 = scalar_select %p33, %s35, %s26
      %p37 = scmp.ge.s32.totalorder %s36, 2
      %s38 = scalar_select %p37, 0, %s36
      %s39 = ssub.s32 %s26, %s38
      %s40 = ssub.s32 %s27, %s34
      %s41 = sor.u32 %s39, %s40
      %p42 = scmp.eq.s32.totalorder %s41, 0
      %s44 = sadd.s32 %s43, 1
      %s45 = scalar_select %p42, %s43, %s44
      %p48 = pneg %p42
      %p49 = scmp.eq.s32.totalorder %s19, 1
      %p50 = por %p48, %p49
      %p51 = scmp.ne.s32.totalorder %s43, %s46
      %p52 = scmp.eq.s32.totalorder %s19, 0
      %p53 = por %p51, %p52
      %p54 = scmp.ne.s32.totalorder %s43, %s46
      %p55 = scmp.eq.s32.totalorder %s24, 1
      %p56 = por %p54, %p55
      %p57 = scmp.ne.s32.totalorder %s46, %s47
      %p58 = scmp.eq.s32.totalorder %s24, 0
      %p59 = por %p57, %p58
      %p60 = scmp.ne.s32.totalorder %s46, %s47
      %p61 = scmp.eq.s32.totalorder %s25, 1
      %p62 = por %p60, %p61
      %p64 = scmp.ne.s32.totalorder %s47, %s63
      %p65 = scmp.eq.s32.totalorder %s25, 0
      %p66 = por %p64, %p65
      %s68 = sadd.s32 %s67, 1
      %p71 = scmp.eq.s32.totalorder %s19, 1
      %p72 = scmp.ne.s32.totalorder %s67, %s69
      %p73 = scmp.eq.s32.totalorder %s19, 0
      %p74 = por %p72, %p73
      %p75 = scmp.ne.s32.totalorder %s67, %s69
      %p76 = scmp.eq.s32.totalorder %s24, 1
      %p77 = por %p75, %p76
      %p78 = scmp.ne.s32.totalorder %s69, %s70
      %p79 = scmp.eq.s32.totalorder %s24, 0
      %p80 = por %p78, %p79
      %p81 = scmp.ne.s32.totalorder %s69, %s70
      %p82 = scmp.eq.s32.totalorder %s25, 1
      %p83 = por %p81, %p82
      %p85 = scmp.ne.s32.totalorder %s70, %s84
      %p86 = scmp.eq.s32.totalorder %s25, 0
      %p87 = por %p85, %p86
      %s89 = sadd.s32 %s88, 1
      %p92 = scmp.eq.s32.totalorder %s19, 1
      %p93 = scmp.ne.s32.totalorder %s88, %s90
      %p94 = scmp.eq.s32.totalorder %s19, 0
      %p95 = por %p93, %p94
      %p96 = scmp.ne.s32.totalorder %s88, %s90
      %p97 = scmp.eq.s32.totalorder %s24, 1
      %p98 = por %p96, %p97
      %p99 = scmp.ne.s32.totalorder %s90, %s91
      %p100 = scmp.eq.s32.totalorder %s24, 0
      %p101 = por %p99, %p100
      %p102 = scmp.ne.s32.totalorder %s90, %s91
      %p103 = scmp.eq.s32.totalorder %s25, 1
      %p104 = por %p102, %p103
      %p106 = scmp.ne.s32.totalorder %s91, %s105
      %p107 = scmp.eq.s32.totalorder %s25, 0
      %p108 = por %p106, %p107
      %s109 = ssub.s32 %s26, %s38
      %s110 = ssub.s32 %s27, %s34
      %s111 = sor.u32 %s109, %s110
      %p112 = scmp.eq.s32.totalorder %s111, 0
      %s114 = sadd.s32 %s113, 1
      %s115 = scalar_select %p112, %s113, %s114
      %p118 = pneg %p112
      %p119 = scmp.eq.s32.totalorder %s19, 1
      %p120 = por %p118, %p119
      %p121 = scmp.ne.s32.totalorder %s113, %s116
      %p122 = scmp.eq.s32.totalorder %s19, 0
      %p123 = por %p121, %p122
      %p124 = scmp.ne.s32.totalorder %s113, %s116
      %p125 = scmp.eq.s32.totalorder %s24, 1
      %p126 = por %p124, %p125
      %p127 = scmp.ne.s32.totalorder %s116, %s117
      %p128 = scmp.eq.s32.totalorder %s24, 0
      %p129 = por %p127, %p128
      %p130 = scmp.ne.s32.totalorder %s116, %s117
      %p131 = scmp.eq.s32.totalorder %s25, 1
      %p132 = por %p130, %p131
      %p134 = scmp.ne.s32.totalorder %s117, %s133
      %p135 = scmp.eq.s32.totalorder %s25, 0
      %p136 = por %p134, %p135
      %s137 = ssub.s32 %s26, %s38
      %s138 = ssub.s32 %s27, %s34
      %s139 = sor.u32 %s137, %s138
      %p140 = scmp.eq.s32.totalorder %s139, 0
      %s142 = sadd.s32 %s141, 1
      %s143 = scalar_select %p140, %s141, %s142
      %p146 = pneg %p140
      %p147 = scmp.eq.s32.totalorder %s19, 1
      %p148 = por %p146, %p147
      %p149 = scmp.ne.s32.totalorder %s141, %s144
      %p150 = scmp.eq.s32.totalorder %s19, 0
      %p151 = por %p149, %p150
      %p152 = scmp.ne.s32.totalorder %s141, %s144
      %p153 = scmp.eq.s32.totalorder %s24, 1
      %p154 = por %p152, %p153
      %p155 = scmp.ne.s32.totalorder %s144, %s145
      %p156 = scmp.eq.s32.totalorder %s24, 0
      %p157 = por %p155, %p156
      %p158 = scmp.ne.s32.totalorder %s144, %s145
      %p159 = scmp.eq.s32.totalorder %s25, 1
      %p160 = por %p158, %p159
      %p162 = scmp.ne.s32.totalorder %s145, %s161
      %p163 = scmp.eq.s32.totalorder %s25, 0
      %p164 = por %p162, %p163
      %s165 = ssub.s32 %s26, %s38
      %s166 = ssub.s32 %s27, %s34
      %s167 = sor.u32 %s165, %s166
      %p168 = scmp.eq.s32.totalorder %s167, 0
      %s170 = sadd.s32 %s169, 1
      %s171 = scalar_select %p168, %s169, %s170
      %p174 = pneg %p168
      %p175 = scmp.eq.s32.totalorder %s19, 1
      %p176 = por %p174, %p175
      %p177 = scmp.ne.s32.totalorder %s169, %s172
      %p178 = scmp.eq.s32.totalorder %s19, 0
      %p179 = por %p177, %p178
      %p180 = scmp.ne.s32.totalorder %s169, %s172
      %p181 = scmp.eq.s32.totalorder %s24, 1
      %p182 = por %p180, %p181
      %p183 = scmp.ne.s32.totalorder %s172, %s173
      %p184 = scmp.eq.s32.totalorder %s24, 0
      %p185 = por %p183, %p184
      %p186 = scmp.ne.s32.totalorder %s172, %s173
      %p187 = scmp.eq.s32.totalorder %s25, 1
      %p188 = por %p186, %p187
      %p190 = scmp.ne.s32.totalorder %s173, %s189
      %p191 = scmp.eq.s32.totalorder %s25, 0
      %p192 = por %p190, %p191
      %p193 = scmp.le.s32.totalorder 1, %s19
      %p194 = scmp.lt.s32.totalorder %s19, 3
      %p195 = pnand %p193, %p194
      %p196 = pneg %p195
      // Predicated region
      $region9: #{tpu_custom_call.1} parent=5 // pred_check
        _
      $region10: #{tpu_custom_call.1} parent=5 // pred_check_branch
        %198 = sbr.rel (%p195) target = $region12
      $region11: #{tpu_custom_call.1} parent=5 // pred_region
        %s199 = ssub.s32 %s19, 1
        // Predicated region
        $region13: #{tpu_custom_call.1} parent=11 // pred_check
          %p200 = pneg %p80
        $region14: #{tpu_custom_call.1} parent=11 // pred_check_branch
          %202 = sbr.rel (%p200) target = $region16
        $region15: #{tpu_custom_call.1} parent=11 // pred_region
          %s204 = ssub.s32 256, 256
          %205 = vsyncadd [#allocation6], %s204
          %s206 = sshll.u32 [#allocation5], 4
          %s207 = int_to_ptr.vmem [resolvable:$true] %s206
          %212 = dma.hbm_to_vmem [thread:$0]  %s1, 256, %s207, [#allocation6], 64, 64, 4
        $region16: #{tpu_custom_call.1} parent=11 // pred_fallthru
          _
        // Predicated region
        $region17: #{tpu_custom_call.1} parent=11 // pred_check
          %p213 = pneg %p101
        $region18: #{tpu_custom_call.1} parent=11 // pred_check_branch
          %215 = sbr.rel (%p213) target = $region20
        $region19: #{tpu_custom_call.1} parent=11 // pred_region
          _
        $region20: #{tpu_custom_call.1} parent=11 // pred_fallthru
          _
      $region12: #{tpu_custom_call.1} parent=5 // pred_fallthru
        _
      %p216 = scmp.lt.s32.totalorder %s19, 2
      // Predicated region
      $region21: #{tpu_custom_call.1} parent=5 // pred_check
        %p217 = pneg %p216
      $region22: #{tpu_custom_call.1} parent=5 // pred_check_branch
        %219 = sbr.rel (%p217) target = $region24
      $region23: #{tpu_custom_call.1} parent=5 // pred_region
        // Predicated region
        $region25: #{tpu_custom_call.1} parent=23 // pred_check
          %p220 = pneg %p53
        $region26: #{tpu_custom_call.1} parent=23 // pred_check_branch
          %222 = sbr.rel (%p220) target = $region28
        $region27: #{tpu_custom_call.1} parent=23 // pred_region
          %s223 = sand.u32 %s43, 1
          %s224 = scalar_lea.sflag [#allocation3], %s223
          %s225 = sand.u32 %s43, 1
          %s226 = smul.addr %s225, 8
          %s227 = scalar_lea.vmem [#allocation2], %s226
          %s229 = ssub.s32 128, 128
          %230 = vsyncadd %s224, %s229
          %s231 = smul.addr %s27, 2
          %s232 = smul.addr %s26, 2
          %s233 = sadd.s32 %s231, %s232
          %s234 = smul.addr %s233, 64
          %s235 = scalar_lea.hbm %s0, %s234
          %s236 = sshll.u32 %s227, 4
          %s237 = int_to_ptr.vmem [resolvable:$true] %s236
          %242 = dma.hbm_to_vmem [thread:$0]  %s235, 128, %s237, %s224, 64, 64, 4
        $region28: #{tpu_custom_call.1} parent=23 // pred_fallthru
          _
      $region24: #{tpu_custom_call.1} parent=5 // pred_fallthru
        _
      %p243 = scmp.le.s32.totalorder 1, %s19
      %p244 = scmp.lt.s32.totalorder %s19, 3
      %p245 = pnand %p243, %p244
      %p246 = pneg %p245
      // Predicated region
      $region29: #{tpu_custom_call.1} parent=5 // pred_check
        _
      $region30: #{tpu_custom_call.1} parent=5 // pred_check_branch
        %248 = sbr.rel (%p245) target = $region32
      $region31: #{tpu_custom_call.1} parent=5 // pred_region
        %s249 = ssub.s32 %s19, 1
        %s250 = sand.u32 %s46, 1
        %s251 = scalar_lea.sflag [#allocation3], %s250
        %s252 = sand.u32 %s46, 1
        %s253 = smul.addr %s252, 8
        %s254 = scalar_lea.vmem [#allocation2], %s253
        // Predicated region
        $region33: #{tpu_custom_call.1} parent=31 // pred_check
          %p255 = pneg %p59
        $region34: #{tpu_custom_call.1} parent=31 // pred_check_branch
          %257 = sbr.rel (%p255) target = $region36
        $region35: #{tpu_custom_call.1} parent=31 // pred_region
          %258 = dma.done %s251, 128
        $region36: #{tpu_custom_call.1} parent=31 // pred_fallthru
          _
        // Predicated region
        $region37: #{tpu_custom_call.1} parent=31 // pred_check
          %p259 = pneg %p80
        $region38: #{tpu_custom_call.1} parent=31 // pred_check_branch
          %261 = sbr.rel (%p259) target = $region40
        $region39: #{tpu_custom_call.1} parent=31 // pred_region
          %262 = dma.done [#allocation6], 256
        $region40: #{tpu_custom_call.1} parent=31 // pred_fallthru
          _
        %s263 = sand.u32 %s46, 1
        %s264 = scalar_lea.sflag [#allocation3], %s263
        %s265 = sand.u32 %s46, 1
        %s266 = smul.addr %s265, 8
        %s267 = scalar_lea.vmem [#allocation2], %s266
        %p268 = pneg %p59
        %p269 = pneg %p56
        %p270 = pneg %p80
        %p271 = pneg %p77
        %p272 = pneg %p101
        %p273 = pneg %p98
        %p274 = pneg %p129
        %p275 = pneg %p126
        %s276 = sand.u32 %s116, 1
        %s277 = scalar_lea.sflag [#allocation4], %s276
        %s278 = sand.u32 %s116, 1
        %s279 = smul.addr %s278, 4
        %s280 = scalar_lea.vmem [#allocation7], %s279
        %p281 = pneg %p157
        %p282 = pneg %p154
        %p283 = scmp.lt.s32.totalorder %s28, 1
        %s284 = scalar_select %p283, %s28, 1
        %p285 = scmp.lt.s32.totalorder %s29, 0
        %s286 = scalar_select %p285, %s29, 0
        %s287 = sadd.s32 %s286, %s284
        %s288 = smul.addr %s287, 8
        %s289 = scalar_lea.vmem %s4, %s288
        %p290 = pneg %p185
        %p291 = pneg %p182
        %p292 = scmp.lt.s32.totalorder %s28, 1
        %s293 = scalar_select %p292, %s28, 1
        %p294 = scmp.lt.s32.totalorder %s29, 0
        %s295 = scalar_select %p294, %s29, 0
        %s296 = sadd.s32 %s295, %s293
        %s297 = smul.addr %s296, 8
        %s298 = scalar_lea.vmem %s5, %s297
        %p299 = scmp.lt.s32.totalorder %s28, 1
        %s300 = scalar_select %p299, %s28, 1
        %p301 = scmp.lt.s32.totalorder %s29, 0
        %s302 = scalar_select %p301, %s29, 0
        %s303 = sadd.s32 %s302, %s300
        %s304 = smul.addr %s303, 8
        %s305 = scalar_lea.vmem %s4, %s304
        %p306 = scmp.lt.s32.totalorder %s28, 1
        %s307 = scalar_select %p306, %s28, 1
        %p308 = scmp.lt.s32.totalorder %s29, 0
        %s309 = scalar_select %p308, %s29, 0
        %s310 = sadd.s32 %s309, %s307
        %s311 = smul.addr %s310, 8
        %s312 = scalar_lea.vmem %s5, %s311
        %v314 = vld [vmem:[%s254] sm:$0xf]
        %v315 = vld [vmem:[%s254 + $0x4] sm:$0xf]
        %v316 = vld [vmem:[#allocation5] sm:$0xf]
        %s317 = scalar_lea.vmem [#allocation5], 4
        %v318 = vld [vmem:[%s317] sm:$0xf]
        %v321 = vunpack.c.l.b16 %v314
        %v322 = vunpack.c.l.b16 %v315
        %v323 = vpack.c.b16 %v322, %v321
        %324 = vrot.lane.b32.xlu0 %v323, 127
        %v325 = vpop.permute.xlu0 %324
        %vm327 = vcmask 130048
        %v329 = vsel %vm327, %v318, 0
        %331 = vmatprep.subr.bf16.mxu0 0
        %332 = vmatpush1.bf16.msra.mxu0 %v325
        %333 = vmatprep.subr.bf16.mxu0 0
        %334 = vmatpush1.bf16.msra.mxu0 0
        %335 = vmatprep.subr.bf16.mxu0 0
        %336 = vmatpush1.bf16.msra.mxu0 0
        %337 = vmatprep.subr.bf16.mxu0 0
        %338 = vmatpush1.bf16.msra.mxu0 0
        %339 = vmatprep.subr.bf16.mxu0 0
        %340 = vmatpush1.bf16.msra.mxu0 0
        %341 = vmatprep.subr.bf16.mxu0 0
        %342 = vmatpush1.bf16.msra.mxu0 0
        %343 = vmatprep.subr.bf16.mxu0 0
        %344 = vmatpush1.bf16.msra.mxu0 0
        %345 = vmatprep.subr.bf16.mxu0 0
        %346 = vmatpush1.bf16.msra.mxu0 0
        %347 = vmatprep.subr.bf16.mxu0 0
        %348 = vmatpush1.bf16.msra.mxu0 0
        %349 = vmatprep.subr.bf16.mxu0 0
        %350 = vmatpush1.bf16.msra.mxu0 0
        %351 = vmatprep.subr.bf16.mxu0 0
        %352 = vmatpush1.bf16.msra.mxu0 0
        %353 = vmatprep.subr.bf16.mxu0 0
        %354 = vmatpush1.bf16.msra.mxu0 0
        %355 = vmatprep.subr.bf16.mxu0 0
        %356 = vmatpush1.bf16.msra.mxu0 0
        %357 = vmatprep.subr.bf16.mxu0 0
        %358 = vmatpush1.bf16.msra.mxu0 0
        %359 = vmatprep.subr.bf16.mxu0 0
        %360 = vmatpush1.bf16.msra.mxu0 0
        %361 = vmatprep.subr.bf16.mxu0 0
        %362 = vmatpush1.bf16.msra.mxu0 0
        %363 = vmatprep.mubr.bf16.mxu0 0
        %364 = vmatmul.mubr.bf16.gmra.mrb[0].mxu0 %v329
        %v365 = vpop.f32.mrb[0].mxu0
        %v366 = vadd.f32 0.0, %v365
        %v367 = vpop.f32.mrb[0].mxu0
        %v368 = vpop.f32.mrb[0].mxu0
        %v369 = vpop.f32.mrb[0].mxu0
        %370 = vdwg.mxu0
        %v373 = vsel %vm327, %v316, 0
        %375 = vmatprep.subr.bf16.mxu0 0
        %376 = vmatpush1.bf16.msra.mxu0 %v323
        %377 = vmatprep.subr.bf16.mxu0 0
        %378 = vmatpush1.bf16.msra.mxu0 0
        %379 = vmatprep.subr.bf16.mxu0 0
        %380 = vmatpush1.bf16.msra.mxu0 0
        %381 = vmatprep.subr.bf16.mxu0 0
        %382 = vmatpush1.bf16.msra.mxu0 0
        %383 = vmatprep.subr.bf16.mxu0 0
        %384 = vmatpush1.bf16.msra.mxu0 0
        %385 = vmatprep.subr.bf16.mxu0 0
        %386 = vmatpush1.bf16.msra.mxu0 0
        %387 = vmatprep.subr.bf16.mxu0 0
        %388 = vmatpush1.bf16.msra.mxu0 0
        %389 = vmatprep.subr.bf16.mxu0 0
        %390 = vmatpush1.bf16.msra.mxu0 0
        %391 = vmatprep.subr.bf16.mxu0 0
        %392 = vmatpush1.bf16.msra.mxu0 0
        %393 = vmatprep.subr.bf16.mxu0 0
        %394 = vmatpush1.bf16.msra.mxu0 0
        %395 = vmatprep.subr.bf16.mxu0 0
        %396 = vmatpush1.bf16.msra.mxu0 0
        %397 = vmatprep.subr.bf16.mxu0 0
        %398 = vmatpush1.bf16.msra.mxu0 0
        %399 = vmatprep.subr.bf16.mxu0 0
        %400 = vmatpush1.bf16.msra.mxu0 0
        %401 = vmatprep.subr.bf16.mxu0 0
        %402 = vmatpush1.bf16.msra.mxu0 0
        %403 = vmatprep.subr.bf16.mxu0 0
        %404 = vmatpush1.bf16.msra.mxu0 0
        %405 = vmatprep.subr.bf16.mxu0 0
        %406 = vmatpush1.bf16.msra.mxu0 0
        %407 = vmatprep.mubr.bf16.mxu0 0
        %408 = vmatmul.mubr.bf16.gmra.mrb[0].mxu0 %v373
        %v409 = vpop.f32.mrb[0].mxu0
        %v410 = vadd.f32 %v366, %v409
        %v411 = vpop.f32.mrb[0].mxu0
        %v412 = vpop.f32.mrb[0].mxu0
        %v413 = vpop.f32.mrb[0].mxu0
        %414 = vdwg.mxu0
        %s415 = scalar_lea.vmem [#allocation5], 8
        %v416 = vld [vmem:[%s415] sm:$0xf]
        %417 = vrot.lane.b32.xlu0 %v323, 119
        %v418 = vpop.permute.xlu0 %417
        %v421 = vsel %vm327, %v416, 0
        %423 = vmatprep.subr.bf16.mxu0 0
        %424 = vmatpush1.bf16.msra.mxu0 %v418
        %425 = vmatprep.subr.bf16.mxu0 0
        %426 = vmatpush1.bf16.msra.mxu0 0
        %427 = vmatprep.subr.bf16.mxu0 0
        %428 = vmatpush1.bf16.msra.mxu0 0
        %429 = vmatprep.subr.bf16.mxu0 0
        %430 = vmatpush1.bf16.msra.mxu0 0
        %431 = vmatprep.subr.bf16.mxu0 0
        %432 = vmatpush1.bf16.msra.mxu0 0
        %433 = vmatprep.subr.bf16.mxu0 0
        %434 = vmatpush1.bf16.msra.mxu0 0
        %435 = vmatprep.subr.bf16.mxu0 0
        %436 = vmatpush1.bf16.msra.mxu0 0
        %437 = vmatprep.subr.bf16.mxu0 0
        %438 = vmatpush1.bf16.msra.mxu0 0
        %439 = vmatprep.subr.bf16.mxu0 0
        %440 = vmatpush1.bf16.msra.mxu0 0
        %441 = vmatprep.subr.bf16.mxu0 0
        %442 = vmatpush1.bf16.msra.mxu0 0
        %443 = vmatprep.subr.bf16.mxu0 0
        %444 = vmatpush1.bf16.msra.mxu0 0
        %445 = vmatprep.subr.bf16.mxu0 0
        %446 = vmatpush1.bf16.msra.mxu0 0
        %447 = vmatprep.subr.bf16.mxu0 0
        %448 = vmatpush1.bf16.msra.mxu0 0
        %449 = vmatprep.subr.bf16.mxu0 0
        %450 = vmatpush1.bf16.msra.mxu0 0
        %451 = vmatprep.subr.bf16.mxu0 0
        %452 = vmatpush1.bf16.msra.mxu0 0
        %453 = vmatprep.subr.bf16.mxu0 0
        %454 = vmatpush1.bf16.msra.mxu0 0
        %455 = vmatprep.mubr.bf16.mxu0 0
        %456 = vmatmul.mubr.bf16.gmra.mrb[0].mxu0 %v421
        %v457 = vpop.f32.mrb[0].mxu0
        %v458 = vadd.f32 0.0, %v457
        %v459 = vpop.f32.mrb[0].mxu0
        %v460 = vpop.f32.mrb[0].mxu0
        %v461 = vpop.f32.mrb[0].mxu0
        %462 = vdwg.mxu0
        %v463 = vadd.f32 %v410, %v458
        %s464 = scalar_lea.vmem [#allocation5], 12
        %v465 = vld [vmem:[%s464] sm:$0xf]
        %466 = vrot.lane.b32.xlu0 %v323, 118
        %v467 = vpop.permute.xlu0 %466
        %v470 = vsel %vm327, %v465, 0
        %472 = vmatprep.subr.bf16.mxu0 0
        %473 = vmatpush1.bf16.msra.mxu0 %v467
        %474 = vmatprep.subr.bf16.mxu0 0
        %475 = vmatpush1.bf16.msra.mxu0 0
        %476 = vmatprep.subr.bf16.mxu0 0
        %477 = vmatpush1.bf16.msra.mxu0 0
        %478 = vmatprep.subr.bf16.mxu0 0
        %479 = vmatpush1.bf16.msra.mxu0 0
        %480 = vmatprep.subr.bf16.mxu0 0
        %481 = vmatpush1.bf16.msra.mxu0 0
        %482 = vmatprep.subr.bf16.mxu0 0
        %483 = vmatpush1.bf16.msra.mxu0 0
        %484 = vmatprep.subr.bf16.mxu0 0
        %485 = vmatpush1.bf16.msra.mxu0 0
        %486 = vmatprep.subr.bf16.mxu0 0
        %487 = vmatpush1.bf16.msra.mxu0 0
        %488 = vmatprep.subr.bf16.mxu0 0
        %489 = vmatpush1.bf16.msra.mxu0 0
        %490 = vmatprep.subr.bf16.mxu0 0
        %491 = vmatpush1.bf16.msra.mxu0 0
        %492 = vmatprep.subr.bf16.mxu0 0
        %493 = vmatpush1.bf16.msra.mxu0 0
        %494 = vmatprep.subr.bf16.mxu0 0
        %495 = vmatpush1.bf16.msra.mxu0 0
        %496 = vmatprep.subr.bf16.mxu0 0
        %497 = vmatpush1.bf16.msra.mxu0 0
        %498 = vmatprep.subr.bf16.mxu0 0
        %499 = vmatpush1.bf16.msra.mxu0 0
        %500 = vmatprep.subr.bf16.mxu0 0
        %501 = vmatpush1.bf16.msra.mxu0 0
        %502 = vmatprep.subr.bf16.mxu0 0
        %503 = vmatpush1.bf16.msra.mxu0 0
        %504 = vmatprep.mubr.bf16.mxu0 0
        %505 = vmatmul.mubr.bf16.gmra.mrb[0].mxu0 %v470
        %v506 = vpop.f32.mrb[0].mxu0
        %v507 = vadd.f32 0.0, %v506
        %v508 = vpop.f32.mrb[0].mxu0
        %v509 = vpop.f32.mrb[0].mxu0
        %v510 = vpop.f32.mrb[0].mxu0
        %511 = vdwg.mxu0
        %v512 = vadd.f32 %v463, %v507
        %v513 = vpack.c.bf16 %v512, %v512
        %vm514 = vcmask 584704
        %515 = vst.msk [vmem:[%s280] sm:$0xf] %vm514, %v513
        %v516 = vld [vmem:[%s2] sm:$0x1]
        %v518 = vlaneseq
        %v519 = vshrl.u32 %v518, 7
        %v520 = vsub.s32 0, %v519
        %v521 = vrot.slane %v516, %v520
        %v523 = vmul.f32 %v512, %v521
        %vm524 = vcmask 588800
        %v525 = vsel %vm524, %v523, 0.0
        %526 = vadd.xlane.f32.xlu0 %v525
        %v527 = vpop.xlane.xlu0 %526
        %vm528 = vcmask 7168
        %529 = vst.msk [vmem:[%s305] sm:$0xff] %vm528, %v527
        %v530 = vmul.f32 %v523, %v523
        %v531 = vsel %vm524, %v530, 0.0
        %532 = vadd.xlane.f32.xlu0 %v531
        %v533 = vpop.xlane.xlu0 %532
        %534 = vst.msk [vmem:[%s312] sm:$0xff] %vm528, %v533
        %s535 = sand.u32 %s116, 1
        %s536 = scalar_lea.sflag [#allocation4], %s535
        %s537 = sand.u32 %s116, 1
        %s538 = smul.addr %s537, 4
        %s539 = scalar_lea.vmem [#allocation7], %s538
        %p540 = scmp.lt.s32.totalorder %s28, 1
        %s541 = scalar_select %p540, %s28, 1
        %p542 = scmp.lt.s32.totalorder %s29, 0
        %s543 = scalar_select %p542, %s29, 0
        %s544 = sadd.s32 %s543, %s541
        %s545 = smul.addr %s544, 8
        %s546 = scalar_lea.vmem %s4, %s545
        %p547 = scmp.lt.s32.totalorder %s28, 1
        %s548 = scalar_select %p547, %s28, 1
        %p549 = scmp.lt.s32.totalorder %s29, 0
        %s550 = scalar_select %p549, %s29, 0
        %s551 = sadd.s32 %s550, %s548
        %s552 = smul.addr %s551, 8
        %s553 = scalar_lea.vmem %s5, %s552
        // Predicated region
        $region41: #{tpu_custom_call.1} parent=31 // pred_check
          %p554 = pneg %p126
        $region42: #{tpu_custom_call.1} parent=31 // pred_check_branch
          %556 = sbr.rel (%p554) target = $region44
        $region43: #{tpu_custom_call.1} parent=31 // pred_region
          %s558 = ssub.s32 64, 64
          %559 = vsyncadd %s536, %s558
          %s560 = sadd.s32 %s29, %s28
          %s561 = smul.addr %s560, 64
          %s562 = scalar_lea.hbm %s3, %s561
          %s564 = sshll.u32 %s539, 4
          %s565 = int_to_ptr.vmem [resolvable:$true] %s564
          %567 = dma.vmem_to_hbm [thread:$0]  %s565, 64, %s562, %s536
        $region44: #{tpu_custom_call.1} parent=31 // pred_fallthru
          _
        // Predicated region
        $region45: #{tpu_custom_call.1} parent=31 // pred_check
          %p568 = pneg %p154
        $region46: #{tpu_custom_call.1} parent=31 // pred_check_branch
          %570 = sbr.rel (%p568) target = $region48
        $region47: #{tpu_custom_call.1} parent=31 // pred_region
          _
        $region48: #{tpu_custom_call.1} parent=31 // pred_fallthru
          _
        // Predicated region
        $region49: #{tpu_custom_call.1} parent=31 // pred_check
          %p571 = pneg %p182
        $region50: #{tpu_custom_call.1} parent=31 // pred_check_branch
          %573 = sbr.rel (%p571) target = $region52
        $region51: #{tpu_custom_call.1} parent=31 // pred_region
          _
        $region52: #{tpu_custom_call.1} parent=31 // pred_fallthru
          _
      $region32: #{tpu_custom_call.1} parent=5 // pred_fallthru
        _
      %p574 = scmp.le.s32.totalorder 2, %s19
      // Predicated region
      $region53: #{tpu_custom_call.1} parent=5 // pred_check
        %p575 = pneg %p574
      $region54: #{tpu_custom_call.1} parent=5 // pred_check_branch
        %577 = sbr.rel (%p575) target = $region56
      $region55: #{tpu_custom_call.1} parent=5 // pred_region
        %s578 = ssub.s32 %s19, 2
        // Predicated region
        $region57: #{tpu_custom_call.1} parent=55 // pred_check
          %p579 = pneg %p132
        $region58: #{tpu_custom_call.1} parent=55 // pred_check_branch
          %581 = sbr.rel (%p579) target = $region60
        $region59: #{tpu_custom_call.1} parent=55 // pred_region
          %s582 = sand.u32 %s117, 1
          %s583 = scalar_lea.sflag [#allocation4], %s582
          %s584 = sand.u32 %s117, 1
          %s585 = smul.addr %s584, 4
          %s586 = scalar_lea.vmem [#allocation7], %s585
          %587 = dma.done %s583, 64
        $region60: #{tpu_custom_call.1} parent=55 // pred_fallthru
          _
        // Predicated region
        $region61: #{tpu_custom_call.1} parent=55 // pred_check
          %p588 = pneg %p160
        $region62: #{tpu_custom_call.1} parent=55 // pred_check_branch
          %590 = sbr.rel (%p588) target = $region64
        $region63: #{tpu_custom_call.1} parent=55 // pred_region
          %p591 = scmp.lt.s32.totalorder %s30, 1
          %s592 = scalar_select %p591, %s30, 1
          %p593 = scmp.lt.s32.totalorder %s31, 0
          %s594 = scalar_select %p593, %s31, 0
          %s595 = sadd.s32 %s594, %s592
          %s596 = smul.addr %s595, 8
          %s597 = scalar_lea.vmem %s4, %s596
        $region64: #{tpu_custom_call.1} parent=55 // pred_fallthru
          _
        // Predicated region
        $region65: #{tpu_custom_call.1} parent=55 // pred_check
          %p598 = pneg %p188
        $region66: #{tpu_custom_call.1} parent=55 // pred_check_branch
          %600 = sbr.rel (%p598) target = $region68
        $region67: #{tpu_custom_call.1} parent=55 // pred_region
          %p601 = scmp.lt.s32.totalorder %s30, 1
          %s602 = scalar_select %p601, %s30, 1
          %p603 = scmp.lt.s32.totalorder %s31, 0
          %s604 = scalar_select %p603, %s31, 0
          %s605 = sadd.s32 %s604, %s602
          %s606 = smul.addr %s605, 8
          %s607 = scalar_lea.vmem %s5, %s606
        $region68: #{tpu_custom_call.1} parent=55 // pred_fallthru
          _
      $region56: #{tpu_custom_call.1} parent=5 // pred_fallthru
        _
    $region6: #{tpu_custom_call.1} parent=1 // loop_footer
      %s23 = sadd.s32 1, %s19
    $region7: #{tpu_custom_call.1} parent=1 // loop_footer_branch
      %18 = sbr.rel target = $region3
    $region8: #{tpu_custom_call.1} parent=1 // loop_exit
      _
    %608 = vsyncpa [#allocation3], 1
    %s609 = scalar_lea.sflag [#allocation3], 1
    %610 = vsyncpa %s609, 1
    %611 = vsyncpa [#allocation6], 1
    %612 = vsyncpa [#allocation4], 1
    %s613 = scalar_lea.sflag [#allocation4], 1
    %614 = vsyncpa %s613, 1

</llo_original>
